<compile_context>
chip_gen: v5e
topology: v5e:2x2
jax: 0.10.0
libtpu: 0.0.40
codegen_flags: <defaults>
</compile_context>

<pallas_src>
import functools

import jax
import jax.numpy as jnp
from jax.experimental import pallas as pl
from jax.experimental.pallas import tpu as pltpu


def mlp_kernel(xT_ref, w1_ref, b1_ref, w2_ref, b2_ref, oT_ref):
    """One batch tile, transposed layout (batch on the lane axis).

    xT_ref : (in_nodes, TB)      current batch tile of x^T
    w1_ref : (hidden, in_nodes)  fc1 weight (PyTorch layout), resident across grid
    b1_ref : (hidden, 1)
    w2_ref : (out,    hidden)    fc2 weight (PyTorch layout), resident across grid
    b2_ref : (out, 1)
    oT_ref : (out, TB)           softmax output, transposed
    """
    # fc1 + bias + ReLU   (dropout p=0.5 is identity in eval mode)
    h = jnp.dot(w1_ref[...], xT_ref[...], preferred_element_type=jnp.float32)
    h = jnp.maximum(h + b1_ref[...], 0.0)

    # fc2 + bias
    logits = jnp.dot(w2_ref[...], h, preferred_element_type=jnp.float32)
    logits = logits + b2_ref[...]

    # softmax over features == axis 0 (sublane axis).  Per-column, so any padded
    # batch lanes in a ragged last tile cannot contaminate valid columns.
    m = jnp.max(logits, axis=0, keepdims=True)
    e = jnp.exp(logits - m)
    denom = jnp.sum(e, axis=0, keepdims=True)
    # approx reciprocal -> EUP vrcp slot (co-issues with VPU work for free).
    oT_ref[...] = (e * pl.reciprocal(denom, approx=True)).astype(oT_ref.dtype)


@functools.partial(jax.jit, static_argnames=("block_b",))
def model_forward(x, w1, b1, w2, b2, *, block_b=512):
    """x: (B, in_nodes); w1: (hidden, in_nodes); b1: (hidden,);
    w2: (out_nodes, hidden); b2: (out_nodes,)   (PyTorch nn.Linear layout)."""
    B, in_nodes = x.shape
    hidden, _ = w1.shape
    out_nodes, _ = w2.shape

    # Batch tile on the lane axis: must be a multiple of 128 or cover the full batch.
    if B >= 128:
        tb = min(block_b, (B // 128) * 128)
    else:
        tb = B
    grid = (pl.cdiv(B, tb),)

    xT = x.T                              # (in_nodes, B): batch on lanes
    b1c = b1.reshape(hidden, 1)
    b2c = b2.reshape(out_nodes, 1)

    flops = 2 * B * (in_nodes * hidden + hidden * out_nodes) + 6 * B * out_nodes
    bytes_accessed = 4 * (B * in_nodes + hidden * in_nodes + hidden
                          + out_nodes * hidden + out_nodes + B * out_nodes)
    cost = pl.CostEstimate(flops=flops,
                           transcendentals=B * out_nodes,
                           bytes_accessed=bytes_accessed)

    oT = pl.pallas_call(
        mlp_kernel,
        out_shape=jax.ShapeDtypeStruct((out_nodes, B), jnp.float32),
        grid=grid,
        in_specs=[
            pl.BlockSpec((in_nodes, tb), lambda i: (0, i)),        # x^T tile
            pl.BlockSpec((hidden, in_nodes), lambda i: (0, 0)),    # fc1 W (resident)
            pl.BlockSpec((hidden, 1), lambda i: (0, 0)),           # fc1 b (resident)
            pl.BlockSpec((out_nodes, hidden), lambda i: (0, 0)),   # fc2 W (resident)
            pl.BlockSpec((out_nodes, 1), lambda i: (0, 0)),        # fc2 b (resident)
        ],
        out_specs=pl.BlockSpec((out_nodes, tb), lambda i: (0, i)),
        compiler_params=pltpu.CompilerParams(
            dimension_semantics=("parallel",),       # shard batch grid across TCs (v7x)
            vmem_limit_bytes=32 * 1024 * 1024,       # explicit, safe on v5e/v6e/v7x
        ),
        cost_estimate=cost,
    )(xT, w1, b1c, w2, b2c)

    return oT.T                            # back to (B, out_nodes)


def init_params(key, in_nodes, hidden, out_nodes):
    """PyTorch nn.Linear-style init, PyTorch weight layout (out_features, in_features)."""
    k1, k2, k3, k4 = jax.random.split(key, 4)
    bound1 = 1.0 / jnp.sqrt(in_nodes)
    bound2 = 1.0 / jnp.sqrt(hidden)
    w1 = jax.random.uniform(k1, (hidden, in_nodes), jnp.float32, -bound1, bound1)
    b1 = jax.random.uniform(k2, (hidden,), jnp.float32, -bound1, bound1)
    w2 = jax.random.uniform(k3, (out_nodes, hidden), jnp.float32, -bound2, bound2)
    b2 = jax.random.uniform(k4, (out_nodes,), jnp.float32, -bound2, bound2)
    return w1, b1, w2, b2


if __name__ == "__main__":
    in_nodes, hidden, out_nodes = 16, 10, 4
    batch = 8

    key = jax.random.PRNGKey(0)
    kx, kp = jax.random.split(key)
    x = jax.random.normal(kx, (batch, in_nodes), jnp.float32)
    w1, b1, w2, b2 = init_params(kp, in_nodes, hidden, out_nodes)

    out = model_forward(x, w1, b1, w2, b2)
    out = jax.block_until_ready(out)

    # Reference check against plain JAX (eval-mode semantics, y = x @ W.T + b).
    h = jnp.maximum(x @ w1.T + b1, 0.0)
    logits = h @ w2.T + b2
    ref = jax.nn.softmax(logits, axis=1)
    assert out.shape == (batch, out_nodes)
    # Tolerance loosened slightly for pl.reciprocal(approx=True).
    assert jnp.allclose(out, ref, atol=2e-3, rtol=2e-3), float(jnp.max(jnp.abs(out - ref)))

    print("KERNEL_OK")
</pallas_src>

<mosaic_0001>
module attributes {stable_mosaic.version = 11 : i64} {
  func.func @mlp_kernel(%arg0: i32, %arg1: memref<16x8xf32, #tpu.memory_space<vmem>>, %arg2: memref<10x16xf32, #tpu.memory_space<vmem>>, %arg3: memref<10x1xf32, #tpu.memory_space<vmem>>, %arg4: memref<4x10xf32, #tpu.memory_space<vmem>>, %arg5: memref<4x1xf32, #tpu.memory_space<vmem>>, %arg6: memref<4x8xf32, #tpu.memory_space<vmem>>) attributes {dimension_semantics = [#tpu.dimension_semantics<parallel>], iteration_bounds = array<i64: 1>, scalar_prefetch = 0 : i64, scratch_operands = 0 : i64, tpu.core_type = #tpu.core_type<tc>, window_params = [{transform_indices = @transform_0, window_bounds = array<i64: 16, 8>}, {pipeline_mode = #tpu.pipeline_mode<synchronous>, transform_indices = @transform_1, window_bounds = array<i64: 10, 16>}, {pipeline_mode = #tpu.pipeline_mode<synchronous>, transform_indices = @transform_2, window_bounds = array<i64: 10, 1>}, {pipeline_mode = #tpu.pipeline_mode<synchronous>, transform_indices = @transform_3, window_bounds = array<i64: 4, 10>}, {pipeline_mode = #tpu.pipeline_mode<synchronous>, transform_indices = @transform_4, window_bounds = array<i64: 4, 1>}, {transform_indices = @transform_5, window_bounds = array<i64: 4, 8>}]} {
    %c0 = arith.constant 0 : index
    %c0_0 = arith.constant 0 : index
    %0 = vector.load %arg2[%c0, %c0_0] : memref<10x16xf32, #tpu.memory_space<vmem>>, vector<10x16xf32>
    %c0_1 = arith.constant 0 : index
    %c0_2 = arith.constant 0 : index
    %1 = vector.load %arg1[%c0_1, %c0_2] : memref<16x8xf32, #tpu.memory_space<vmem>>, vector<16x8xf32>
    %cst = arith.constant dense<0.000000e+00> : vector<10x8xf32>
    %2 = tpu.matmul %0, %1, %cst {dimension_numbers = #tpu.dot_dimension_numbers<[1], [0], [0], [1], [0, 0, 1, 1], [], []>} : vector<10x16xf32>, vector<16x8xf32>, vector<10x8xf32> -> vector<10x8xf32>
    %c0_3 = arith.constant 0 : index
    %c0_4 = arith.constant 0 : index
    %3 = vector.load %arg3[%c0_3, %c0_4] : memref<10x1xf32, #tpu.memory_space<vmem>>, vector<10x1xf32>
    %4 = vector.broadcast %3 : vector<10x1xf32> to vector<10x8xf32>
    %5 = arith.addf %2, %4 : vector<10x8xf32>
    %cst_5 = arith.constant 0.000000e+00 : f32
    %6 = vector.broadcast %cst_5 : f32 to vector<10x8xf32>
    %7 = arith.maximumf %5, %6 : vector<10x8xf32>
    %c0_6 = arith.constant 0 : index
    %c0_7 = arith.constant 0 : index
    %8 = vector.load %arg4[%c0_6, %c0_7] : memref<4x10xf32, #tpu.memory_space<vmem>>, vector<4x10xf32>
    %cst_8 = arith.constant dense<0.000000e+00> : vector<4x8xf32>
    %9 = tpu.matmul %8, %7, %cst_8 {dimension_numbers = #tpu.dot_dimension_numbers<[1], [0], [0], [1], [0, 0, 1, 1], [], []>} : vector<4x10xf32>, vector<10x8xf32>, vector<4x8xf32> -> vector<4x8xf32>
    %c0_9 = arith.constant 0 : index
    %c0_10 = arith.constant 0 : index
    %10 = vector.load %arg5[%c0_9, %c0_10] : memref<4x1xf32, #tpu.memory_space<vmem>>, vector<4x1xf32>
    %11 = vector.broadcast %10 : vector<4x1xf32> to vector<4x8xf32>
    %12 = arith.addf %9, %11 : vector<4x8xf32>
    %cst_11 = arith.constant dense<0xFF800000> : vector<8xf32>
    %13 = vector.multi_reduction <maximumf>, %12, %cst_11 [0] : vector<4x8xf32> to vector<8xf32>
    %14 = vector.shape_cast %13 : vector<8xf32> to vector<1x8xf32>
    %15 = vector.broadcast %14 : vector<1x8xf32> to vector<4x8xf32>
    %16 = arith.subf %12, %15 : vector<4x8xf32>
    %17 = math.exp %16 : vector<4x8xf32>
    %cst_12 = arith.constant dense<0.000000e+00> : vector<8xf32>
    %18 = vector.multi_reduction <add>, %17, %cst_12 [0] : vector<4x8xf32> to vector<8xf32>
    %19 = vector.shape_cast %18 : vector<8xf32> to vector<1x8xf32>
    %20 = tpu.reciprocal %19 {approx = true} : vector<1x8xf32> -> vector<1x8xf32>
    %21 = vector.broadcast %20 : vector<1x8xf32> to vector<4x8xf32>
    %22 = arith.mulf %17, %21 : vector<4x8xf32>
    %c0_13 = arith.constant 0 : index
    %c0_14 = arith.constant 0 : index
    %23 = vector.load %arg6[%c0_13, %c0_14] : memref<4x8xf32, #tpu.memory_space<vmem>>, vector<4x8xf32>
    tpu.vector_store %arg6[%c0_13, %c0_14], %22 {strides = array<i32>} : memref<4x8xf32, #tpu.memory_space<vmem>>, vector<4x8xf32>,
    return
  }
  func.func @transform_0(%arg0: i32) -> (i32, i32) {
    %c0_i32 = arith.constant 0 : i32
    %c0_i32_0 = arith.constant 0 : i32
    return %c0_i32, %arg0 : i32, i32
  }
  func.func @transform_1(%arg0: i32) -> (i32, i32) {
    %c0_i32 = arith.constant 0 : i32
    %c0_i32_0 = arith.constant 0 : i32
    %c0_i32_1 = arith.constant 0 : i32
    return %c0_i32, %c0_i32_0 : i32, i32
  }
  func.func @transform_2(%arg0: i32) -> (i32, i32) {
    %c0_i32 = arith.constant 0 : i32
    %c0_i32_0 = arith.constant 0 : i32
    %c0_i32_1 = arith.constant 0 : i32
    return %c0_i32, %c0_i32_0 : i32, i32
  }
  func.func @transform_3(%arg0: i32) -> (i32, i32) {
    %c0_i32 = arith.constant 0 : i32
    %c0_i32_0 = arith.constant 0 : i32
    %c0_i32_1 = arith.constant 0 : i32
    return %c0_i32, %c0_i32_0 : i32, i32
  }
  func.func @transform_4(%arg0: i32) -> (i32, i32) {
    %c0_i32 = arith.constant 0 : i32
    %c0_i32_0 = arith.constant 0 : i32
    %c0_i32_1 = arith.constant 0 : i32
    return %c0_i32, %c0_i32_0 : i32, i32
  }
  func.func @transform_5(%arg0: i32) -> (i32, i32) {
    %c0_i32 = arith.constant 0 : i32
    %c0_i32_0 = arith.constant 0 : i32
    return %c0_i32, %arg0 : i32, i32
  }
}

</mosaic_0001>

<llo_original>
// kernel: model_forward.1
$region0: #{model_forward.1}
  #allocation0 [shape = 'u32[]', space=smem, size = 0x4, offset = 0x4, fixed_abs, tag = 'smem constant byte address 0x4 - core index']
  #allocation1 [shape = 'u32[72,128]{1,0:T(1,128)}', space=vmem, size = 0x9000, scoped, tag = 'internal scratch']
  %s0 = inlined_call_operand.vmem [shape: f32[16,8], index: 0, kind: input, shape index: {}]
  %s1 = inlined_call_operand.vmem [shape: f32[10,16], index: 1, kind: input, shape index: {}]
  %s2 = inlined_call_operand.vmem [shape: f32[10,1], index: 2, kind: input, shape index: {}]
  %s3 = inlined_call_operand.vmem [shape: f32[4,10], index: 3, kind: input, shape index: {}]
  %s4 = inlined_call_operand.vmem [shape: f32[4,1], index: 4, kind: input, shape index: {}]
  %s5 = inlined_call_operand.hbm [shape: f32[4,8], index: 5, kind: output, shape index: {}]
  %s6 = sld [smem:[#allocation0]]
  $region30: #{model_forward.1} parent=0
    _
  %s8 = ssub.s32 1, %s6
  %s9 = scalar_select 0, %s8, %s6
  $region1: #{model_forward.1} parent=0
    #allocation2 [shape = 'u8[2048]{0}', space=vmem, size = 0x800, scoped, tag = 'output window, operand 0, single buffered']
    #allocation3 [shape = 's32[1]{0}', space=sflag, size = 0x4, scoped, tag = 'scoped memory for model_forward.1']
    %10 = vsyncpa [#allocation3], 0
    // Predicated region
    $region2: #{model_forward.1} parent=1 // pred_check
      _
    $region3: #{model_forward.1} parent=1 // pred_check_branch
      %12 = sbr.rel (0) target = $region5
    $region4: #{model_forward.1} parent=1 // pred_region
      _
    $region5: #{model_forward.1} parent=1 // pred_fallthru
      _
    // Predicated region
    $region6: #{model_forward.1} parent=1 // pred_check
      _
    $region7: #{model_forward.1} parent=1 // pred_check_branch
      %14 = sbr.rel (0) target = $region9
    $region8: #{model_forward.1} parent=1 // pred_region
      _
    $region9: #{model_forward.1} parent=1 // pred_fallthru
      _
    // Predicated region
    $region10: #{model_forward.1} parent=1 // pred_check
      _
    $region11: #{model_forward.1} parent=1 // pred_check_branch
      %16 = sbr.rel (0) target = $region13
    $region12: #{model_forward.1} parent=1 // pred_region
      _
    $region13: #{model_forward.1} parent=1 // pred_fallthru
      _
    // Predicated region
    $region14: #{model_forward.1} parent=1 // pred_check
      _
    $region15: #{model_forward.1} parent=1 // pred_check_branch
      %18 = sbr.rel (0) target = $region17
    $region16: #{model_forward.1} parent=1 // pred_region
      _
    $region17: #{model_forward.1} parent=1 // pred_fallthru
      _
    // Predicated region
    $region18: #{model_forward.1} parent=1 // pred_check
      _
    $region19: #{model_forward.1} parent=1 // pred_check_branch
      %20 = sbr.rel (0) target = $region21
    $region20: #{model_forward.1} parent=1 // pred_region
      _
    $region21: #{model_forward.1} parent=1 // pred_fallthru
      _
    %v21 = vld [vmem:[%s1] sm:$0xff]
    %v22 = vld [vmem:[%s1 + $0x8] sm:$0x3]
    %v23 = vld [vmem:[%s0] sm:$0xff]
    %v24 = vld [vmem:[%s0 + $0x8] sm:$0xff]
    %v25 = vld [vmem:[%s2] sm:$0xff]
    %v26 = vld [vmem:[%s2 + $0x8] sm:$0x3]
    %28 = vset.pattern.permute.xlu0 0
    %29 = vperm.xlu0 %28, %v25
    %v30 = vpop.permute.xlu0 %29
    %33 = vset.pattern.permute.xlu0 0
    %34 = vperm.xlu0 %33, %v26
    %v35 = vpop.permute.xlu0 %34
    %vm37 = vcmask 130048
    %v39 = vsel %vm37, %v21, 0
    %v42 = vsel %vm37, %v22, 0
    %44 = vmatpush.msra.mxu0 0.0
    %45 = vmatpush.msra.mxu0 0.0
    %46 = vmatpush.msra.mxu0 0.0
    %47 = vmatpush.msra.mxu0 0.0
    %48 = vmatpush.msra.mxu0 0.0
    %49 = vmatpush.msra.mxu0 0.0
    %50 = vmatpush.msra.mxu0 0.0
    %51 = vmatpush.msra.mxu0 0.0
    %52 = vmatpush.msra.mxu0 0.0
    %53 = vmatpush.msra.mxu0 0.0
    %54 = vmatpush.msra.mxu0 0.0
    %55 = vmatpush.msra.mxu0 0.0
    %56 = vmatpush.msra.mxu0 0.0
    %57 = vmatpush.msra.mxu0 0.0
    %58 = vmatpush.msra.mxu0 %v24
    %59 = vmatpush.msra.mxu0 %v23
    %60 = vmatmul.f32.gmra.mxu0 %v39
    %v61 = vpop.f32.mrf.mxu0
    %v62 = vadd.f32 %v30, %v61
    %63 = vmatmul.f32.gmra.mxu0 %v42
    %v64 = vpop.f32.mrf.mxu0
    %v65 = vadd.f32 %v35, %v64
    %66 = vdwg.mxu0
    %v67 = vmax.f32 %v62, 0.0
    %v68 = vmax.f32 %v65, 0.0
    %v69 = vld [vmem:[%s3] sm:$0xf]
    %v70 = vld [vmem:[%s4] sm:$0xf]
    %72 = vset.pattern.permute.xlu0 0
    %73 = vperm.xlu0 %72, %v70
    %v74 = vpop.permute.xlu0 %73
    %vm76 = vcmask 80896
    %v78 = vsel %vm76, %v69, 0
    %vm80 = vcmask 1041408
    %v82 = vsel %vm80, %v68, 0
    %84 = vmatpush.msra.mxu0 0.0
    %85 = vmatpush.msra.mxu0 0.0
    %86 = vmatpush.msra.mxu0 0.0
    %87 = vmatpush.msra.mxu0 0.0
    %88 = vmatpush.msra.mxu0 0.0
    %89 = vmatpush.msra.mxu0 0.0
    %90 = vmatpush.msra.mxu0 0.0
    %91 = vmatpush.msra.mxu0 0.0
    %92 = vmatpush.msra.mxu0 0.0
    %93 = vmatpush.msra.mxu0 0.0
    %94 = vmatpush.msra.mxu0 0.0
    %95 = vmatpush.msra.mxu0 0.0
    %96 = vmatpush.msra.mxu0 0.0
    %97 = vmatpush.msra.mxu0 0.0
    %98 = vmatpush.msra.mxu0 %v82
    %99 = vmatpush.msra.mxu0 %v67
    %100 = vmatmul.f32.gmra.mxu0 %v78
    %v101 = vpop.f32.mrf.mxu0
    %v102 = vadd.f32 %v74, %v101
    %103 = vdwg.mxu0
    %vm104 = vcmask 60416
    %v105 = vsel %vm104, %v102, -inf
    %v106 = vrot.slane %v105, 4
    %v107 = vmax.f32 %v105, %v106
    %v108 = vrot.slane %v107, 2
    %v109 = vmax.f32 %v107, %v108
    %v110 = vrot.slane %v109, 1
    %v111 = vmax.f32 %v109, %v110
    %v112 = vsub.f32 %v102, %v111
    %v113 = vmul.f32 %v112, 1.442695
    %v114 = vpow.pop %v113
    %v115 = vsel %vm104, %v114, 0.0
    %v116 = vrot.slane %v115, 4
    %v117 = vadd.f32 %v115, %v116
    %v118 = vrot.slane %v117, 2
    %v119 = vadd.f32 %v117, %v118
    %v120 = vrot.slane %v119, 1
    %v121 = vadd.f32 %v119, %v120
    %v122 = vrcp.pop %v121
    %v123 = vmul.f32 %v114, %v122
    %124 = vst.msk [vmem:[#allocation2] sm:$0xf] %vm104, %v123
    // Predicated region
    $region22: #{model_forward.1} parent=1 // pred_check
      _
    $region23: #{model_forward.1} parent=1 // pred_check_branch
      %126 = sbr.rel (0) target = $region25
    $region24: #{model_forward.1} parent=1 // pred_region
      %128 = vsyncadd [#allocation3], 0
      %s130 = sshll.u32 [#allocation2], 4
      %s131 = int_to_ptr.vmem [resolvable:$true] %s130
      %s132 = sshll.u32 %s5, 4
      %s133 = int_to_ptr.hbm [resolvable:$true] %s132
      %135 = dma.vmem_to_hbm [thread:$0]  %s131, 64, %s133, [#allocation3]
    $region25: #{model_forward.1} parent=1 // pred_fallthru
      _
    // Predicated region
    $region26: #{model_forward.1} parent=1 // pred_check
      _
    $region27: #{model_forward.1} parent=1 // pred_check_branch
      %137 = sbr.rel (0) target = $region29
    $region28: #{model_forward.1} parent=1 // pred_region
      %139 = dma.done [#allocation3], 64
    $region29: #{model_forward.1} parent=1 // pred_fallthru
      _
    %140 = vsyncpa [#allocation3], 1

</llo_original>
